<compile_context>
chip_gen: v5e
topology: v5e:2x2
jax: 0.10.0
libtpu: 0.0.40
codegen_flags: <defaults>
</compile_context>

<pallas_src>
import functools

import jax
import jax.numpy as jnp
import numpy as np
from jax.experimental import pallas as pl
from jax.experimental.pallas import tpu as pltpu

LIN_DIM = 20
SUBLANE = 8      # f32 sublane tile
LANE = 128       # lane width


def _round_up(x, m):
    return ((x + m - 1) // m) * m


def _device_kind():
    try:
        return jax.devices()[0].device_kind.lower()
    except Exception:
        return ""


def _lstm_head_kernel(x_ref, w_ih_ref, w_hh_ref, b_ref, w_head_ref, b_head_ref,
                      out_ref, h_ref, c_ref, *maybe_xw, hidden, unroll):
    """One (batch tile, time chunk) grid step of LSTM layer 0 + folded head.

    x_ref:       (chunk, b_tile, F)   bf16 time-major input chunk
    w_ih_ref:    (F, 4H)              bf16  (x @ W_ih^T layout)
    w_hh_ref:    (H, 4H)              bf16  (h @ W_hh^T layout)
    b_ref:       (1, 4H)              f32, b_ih + b_hh folded
    w_head_ref:  (H, 1)               f32, W_lin @ W_out
    b_head_ref:  (1, 1)               f32, b_lin @ W_out + b_out
    out_ref:     (b_tile, 1)          f32, written only at the last time chunk
    h_ref/c_ref: (b_tile, H)          f32 VMEM scratch carrying state across chunks
    maybe_xw:    optional (chunk, b_tile, 4H) f32 VMEM scratch (long-chunk path)
    """
    xw_ref = maybe_xw[0] if maybe_xw else None
    t_idx = pl.program_id(1)

    @pl.when(t_idx == 0)
    def _init():
        h_ref[...] = jnp.zeros_like(h_ref)
        c_ref[...] = jnp.zeros_like(c_ref)

    x = x_ref[...]                                   # (chunk, bt, F) bf16
    t_len, bt, feat = x.shape
    four_h = 4 * hidden
    w_hh = w_hh_ref[...]                             # (H, 4H) bf16

    # Packed gate activation mask: tanh on the g-segment lanes [2H, 3H), sigmoid
    # elsewhere.  Both branches are evaluated (bounded, numerically safe); this is
    # 2 EUP passes per step instead of 4.  Hoisted out of the time loop.
    lane = jax.lax.broadcasted_iota(jnp.int32, (bt, four_h), 1)
    is_g = (lane >= 2 * hidden) & (lane < 3 * hidden)

    def step(h, c, gates_in):
        # Only the recurrent matmul sits on the serial h->h dependence chain;
        # bf16 inputs / f32 accumulate keep it short.
        gates = gates_in + jnp.dot(h.astype(jnp.bfloat16), w_hh,
                                   preferred_element_type=jnp.float32)
        act = jnp.where(is_g, jnp.tanh(gates), jax.nn.sigmoid(gates))
        i_g = act[:, 0 * hidden:1 * hidden]
        f_g = act[:, 1 * hidden:2 * hidden]
        g_g = act[:, 2 * hidden:3 * hidden]
        o_g = act[:, 3 * hidden:4 * hidden]
        c_new = f_g * c + i_g * g_g
        h_new = o_g * jnp.tanh(c_new)
        return h_new, c_new

    # Hoisted input-side projection + bias: ONE MXU dot for the whole chunk.
    xw = jnp.dot(x.reshape(t_len * bt, feat), w_ih_ref[...],
                 preferred_element_type=jnp.float32) + b_ref[...]

    h = h_ref[...]
    c = c_ref[...]

    if xw_ref is None:
        # Short chunk: keep xw as a live value (no VMEM scratch round-trip) and
        # fully unroll the recurrence.
        xw = xw.reshape(t_len, bt, four_h)
        for t in range(t_len):
            h, c = step(h, c, xw[t])
    else:
        # Long chunk: park xw in VMEM scratch (time-major, indexed on its leading
        # axis) and run a bounded-unroll fori over timesteps.
        xw_ref[...] = xw.reshape(t_len, bt, four_h)

        def cell(t, carry):
            hh, cc = carry
            return step(hh, cc, xw_ref[t])

        h, c = jax.lax.fori_loop(0, t_len, cell, (h, c), unroll=unroll)

    h_ref[...] = h
    c_ref[...] = c

    @pl.when(t_idx == pl.num_programs(1) - 1)
    def _finish():
        # Folded head: Linear(H,20) o Linear(20,1) == one (H,1) affine map.
        y = jnp.dot(h, w_head_ref[...], preferred_element_type=jnp.float32)
        out_ref[...] = (y + b_head_ref[...]).astype(out_ref.dtype)


def shallow_regression_lstm(x, params, *, max_b_tile=None, max_chunk=None):
    """x: (B, T, F) float32. Returns (B,) float32 (matches .flatten() in PyTorch).

    max_b_tile / max_chunk are optional tuning/testing overrides for the batch-tile
    and time-chunk sizes.
    """
    batch, seq_len, feat = x.shape
    hidden = params["w_hh0"].shape[0]
    four_h = 4 * hidden

    kind = _device_kind()
    is_v7x = ("v7" in kind) or ("7x" in kind)
    num_tc = 2 if is_v7x else 1            # TensorCores sharing the "parallel" axis
    b_cap = 128 if "v5" in kind else 256   # MXU rows: 128 on v5e, 256 on v6e/v7x

    # ---- fold params (exact: no nonlinearity between the two head linears) ----
    w_head = (params["w_lin"] @ params["w_out"]).astype(jnp.float32)             # (H, 1)
    b_head = (params["b_lin"] @ params["w_out"] + params["b_out"]).astype(jnp.float32)
    bias = params["b0"].reshape(1, four_h).astype(jnp.float32)                   # (1, 4H)
    w_ih = params["w_ih0"].astype(jnp.bfloat16)                                  # (F, 4H)
    w_hh = params["w_hh0"].astype(jnp.bfloat16)                                  # (H, 4H)

    # ---- batch tiling ----
    b_pad = _round_up(batch, SUBLANE)
    eff_cap = b_cap if max_b_tile is None else min(b_cap, _round_up(max_b_tile, SUBLANE))
    num_b = pl.cdiv(b_pad, eff_cap)
    if num_tc >= 2 and b_pad >= 2 * SUBLANE:
        # >=2 batch tiles so the "parallel" axis actually spans both v7x TensorCores.
        num_b = max(num_b, num_tc)
    b_tile = _round_up(pl.cdiv(b_pad, num_b), SUBLANE)
    b_pad = int(num_b * b_tile)

    # ---- time chunking (bounds VMEM independent of T; x DMA overlaps compute) ----
    # Lane-padded per-chunk footprint ~= 1 KiB * b_tile * chunk (bf16 x double-buffered
    # + f32 xw scratch, both padded to 128 lanes), so cap b_tile*chunk by a budget.
    budget_elems = 16384 if is_v7x else 32768
    chunk_cap = max(SUBLANE, (budget_elems // b_tile) // SUBLANE * SUBLANE)
    if max_chunk is not None:
        chunk_cap = min(chunk_cap, max(SUBLANE, (max_chunk // SUBLANE) * SUBLANE))
    if seq_len <= chunk_cap:
        chunk, num_t = seq_len, 1
    else:
        chunk = None
        c = chunk_cap
        while c >= SUBLANE:
            if seq_len % c == 0:
                chunk = c
                break
            c -= SUBLANE
        if chunk is None:
            # TODO(synk): seq_len has no multiple-of-8 divisor <= chunk_cap; fall back
            # to a single full-length chunk (correct, just a larger VMEM footprint).
            chunk, num_t = seq_len, 1
        else:
            num_t = seq_len // chunk

    # Short chunks: skip the xw scratch round-trip and fully unroll the recurrence.
    use_xw_scratch = not (chunk <= 32 and chunk * b_tile <= 256)

    # ---- x layout: time-major bf16 (one fused cast+transpose pass over x) ----
    x_tm = jnp.transpose(x.astype(jnp.bfloat16), (1, 0, 2))          # (T, B, F)
    if b_pad > batch:
        x_tm = jnp.pad(x_tm, ((0, 0), (0, b_pad - batch), (0, 0)))

    # ---- VMEM accounting (lane-padded!) and per-generation scoped limit ----
    def lane_pad(n):
        return _round_up(n, LANE)
    x_block_bytes = 2 * chunk * b_tile * lane_pad(feat) * 2          # bf16, double-buffered
    xw_bytes = chunk * b_tile * lane_pad(four_h) * 4 if use_xw_scratch else 0
    hc_bytes = 2 * b_tile * lane_pad(hidden) * 4
    est = x_block_bytes + xw_bytes + hc_bytes + (2 << 20)            # + weights/out/slack
    vmem_cap = (56 << 20) if is_v7x else (100 << 20)
    vmem_limit = int(min(vmem_cap, max(32 << 20, est + (8 << 20))))

    scratch = [pltpu.VMEM((b_tile, hidden), jnp.float32),            # h carry
               pltpu.VMEM((b_tile, hidden), jnp.float32)]            # c carry
    if use_xw_scratch:
        scratch.append(pltpu.VMEM((chunk, b_tile, four_h), jnp.float32))

    kernel = functools.partial(_lstm_head_kernel, hidden=hidden,
                               unroll=int(min(8, chunk)))

    out = pl.pallas_call(
        kernel,
        out_shape=jax.ShapeDtypeStruct((b_pad, 1), jnp.float32),
        grid=(int(num_b), int(num_t)),
        in_specs=[
            pl.BlockSpec((chunk, b_tile, feat), lambda b, t: (t, b, 0)),   # x chunk
            pl.BlockSpec((feat, four_h), lambda b, t: (0, 0)),             # W_ih
            pl.BlockSpec((hidden, four_h), lambda b, t: (0, 0)),           # W_hh
            pl.BlockSpec((1, four_h), lambda b, t: (0, 0)),                # bias
            pl.BlockSpec((hidden, 1), lambda b, t: (0, 0)),                # folded head W
            pl.BlockSpec((1, 1), lambda b, t: (0, 0)),                     # folded head b
        ],
        out_specs=pl.BlockSpec((b_tile, 1), lambda b, t: (b, 0)),
        scratch_shapes=scratch,
        compiler_params=pltpu.CompilerParams(
            dimension_semantics=("parallel", "arbitrary"),
            vmem_limit_bytes=vmem_limit,
        ),
    )(x_tm, w_ih, w_hh, bias, w_head, b_head)

    return out[:batch, 0]


def init_params(key, num_features, hidden_units):
    """PyTorch-style uniform init, pre-transposed for row-major right-multiplies.

    Only layer-0 LSTM weights are created: the module's head reads hn[0], so layers
    1-4 of the 5-layer LSTM never influence the output.
    """
    ks = jax.random.split(key, 8)
    k_lstm = 1.0 / np.sqrt(hidden_units)

    def u(k, shape, bound):
        return jax.random.uniform(k, shape, jnp.float32, -bound, bound)

    w_ih0 = u(ks[0], (num_features, 4 * hidden_units), k_lstm)   # x @ W_ih^T
    w_hh0 = u(ks[1], (hidden_units, 4 * hidden_units), k_lstm)   # h @ W_hh^T
    b0 = (u(ks[2], (4 * hidden_units,), k_lstm)
          + u(ks[3], (4 * hidden_units,), k_lstm))               # b_ih + b_hh folded

    w_lin = u(ks[4], (hidden_units, LIN_DIM), k_lstm)
    b_lin = u(ks[5], (1, LIN_DIM), k_lstm)
    k_out = 1.0 / np.sqrt(LIN_DIM)
    w_out = u(ks[6], (LIN_DIM, 1), k_out)
    b_out = u(ks[7], (1, 1), k_out)

    return dict(w_ih0=w_ih0, w_hh0=w_hh0, b0=b0,
                w_lin=w_lin, b_lin=b_lin, w_out=w_out, b_out=b_out)


def reference_forward(x, params):
    """Pure-JAX reference of the same math (bf16 MXU inputs, f32 elsewhere, unfused head)."""
    B, T, _ = x.shape
    H = params["w_hh0"].shape[0]
    w_ih = params["w_ih0"].astype(jnp.bfloat16)
    w_hh = params["w_hh0"].astype(jnp.bfloat16)
    xb = x.astype(jnp.bfloat16)
    h = jnp.zeros((B, H), jnp.float32)
    c = jnp.zeros((B, H), jnp.float32)
    for t in range(T):
        gates = (jnp.dot(xb[:, t, :], w_ih, preferred_element_type=jnp.float32)
                 + jnp.dot(h.astype(jnp.bfloat16), w_hh,
                           preferred_element_type=jnp.float32)
                 + params["b0"][None, :])
        i_g = jax.nn.sigmoid(gates[:, 0 * H:1 * H])
        f_g = jax.nn.sigmoid(gates[:, 1 * H:2 * H])
        g_g = jnp.tanh(gates[:, 2 * H:3 * H])
        o_g = jax.nn.sigmoid(gates[:, 3 * H:4 * H])
        c = f_g * c + i_g * g_g
        h = o_g * jnp.tanh(c)
    z = h @ params["w_lin"] + params["b_lin"]
    y = z @ params["w_out"] + params["b_out"]
    return y.reshape(B)


if __name__ == "__main__":
    num_features = 4
    hidden_units = 32     # 4H = 128 -> gates fill exactly one lane dimension

    key = jax.random.PRNGKey(0)
    k_x1, k_x2, k_p = jax.random.split(key, 3)
    params = init_params(k_p, num_features, hidden_units)

    # Primary check (small): single time chunk, no xw scratch, fully unrolled recurrence.
    x1 = jax.random.normal(k_x1, (2, 8, num_features), jnp.float32)
    out1 = jax.block_until_ready(shallow_regression_lstm(x1, params))
    ref1 = reference_forward(x1, params)
    np.testing.assert_allclose(np.asarray(out1), np.asarray(ref1), rtol=5e-3, atol=1e-3)

    # Secondary check: exercises the streaming path -- time chunking with (h, c) carried
    # in VMEM scratch, xw scratch + bounded-unroll fori, 2 batch tiles and batch padding.
    x2 = jax.random.normal(k_x2, (21, 48, num_features), jnp.float32)
    out2 = jax.block_until_ready(
        shallow_regression_lstm(x2, params, max_b_tile=16, max_chunk=24))
    ref2 = reference_forward(x2, params)
    np.testing.assert_allclose(np.asarray(out2), np.asarray(ref2), rtol=5e-3, atol=1e-3)

    print("KERNEL_OK")
</pallas_src>

<mosaic_0001>
module attributes {stable_mosaic.version = 11 : i64} {
  func.func @_lstm_head_kernel(%arg0: i32, %arg1: i32, %arg2: memref<8x8x4xbf16, #tpu.memory_space<vmem>>, %arg3: memref<4x128xbf16, #tpu.memory_space<vmem>>, %arg4: memref<32x128xbf16, #tpu.memory_space<vmem>>, %arg5: memref<1x128xf32, #tpu.memory_space<vmem>>, %arg6: memref<32x1xf32, #tpu.memory_space<vmem>>, %arg7: memref<1x1xf32, #tpu.memory_space<vmem>>, %arg8: memref<8x1xf32, #tpu.memory_space<vmem>>, %arg9: memref<8x32xf32, #tpu.memory_space<vmem>>, %arg10: memref<8x32xf32, #tpu.memory_space<vmem>>) attributes {dimension_semantics = [#tpu.dimension_semantics<parallel>, #tpu.dimension_semantics<arbitrary>], iteration_bounds = array<i64: 1, 1>, scalar_prefetch = 0 : i64, scratch_operands = 2 : i64, tpu.core_type = #tpu.core_type<tc>, window_params = [{transform_indices = @transform_0, window_bounds = array<i64: 8, 8, 4>}, {pipeline_mode = #tpu.pipeline_mode<synchronous>, transform_indices = @transform_1, window_bounds = array<i64: 4, 128>}, {pipeline_mode = #tpu.pipeline_mode<synchronous>, transform_indices = @transform_2, window_bounds = array<i64: 32, 128>}, {pipeline_mode = #tpu.pipeline_mode<synchronous>, transform_indices = @transform_3, window_bounds = array<i64: 1, 128>}, {pipeline_mode = #tpu.pipeline_mode<synchronous>, transform_indices = @transform_4, window_bounds = array<i64: 32, 1>}, {pipeline_mode = #tpu.pipeline_mode<synchronous>, transform_indices = @transform_5, window_bounds = array<i64: 1, 1>}, {transform_indices = @transform_6, window_bounds = array<i64: 8, 1>}]} {
    %c0_i32 = arith.constant 0 : i32
    %0 = arith.cmpi eq, %arg1, %c0_i32 : i32
    %1 = arith.extui %0 : i1 to i32
    %c0_i32_0 = arith.constant 0 : i32
    %2 = arith.cmpi ne, %1, %c0_i32_0 : i32
    scf.if %2 {
      %cst_35 = arith.constant 0.000000e+00 : f32
      %193 = vector.broadcast %cst_35 : f32 to vector<8x32xf32>
      %c0_36 = arith.constant 0 : index
      %c0_37 = arith.constant 0 : index
      %194 = vector.load %arg9[%c0_36, %c0_37] : memref<8x32xf32, #tpu.memory_space<vmem>>, vector<8x32xf32>
      tpu.vector_store %arg9[%c0_36, %c0_37], %193 {strides = array<i32>} : memref<8x32xf32, #tpu.memory_space<vmem>>, vector<8x32xf32>,
      %cst_38 = arith.constant 0.000000e+00 : f32
      %195 = vector.broadcast %cst_38 : f32 to vector<8x32xf32>
      %c0_39 = arith.constant 0 : index
      %c0_40 = arith.constant 0 : index
      %196 = vector.load %arg10[%c0_39, %c0_40] : memref<8x32xf32, #tpu.memory_space<vmem>>, vector<8x32xf32>
      tpu.vector_store %arg10[%c0_39, %c0_40], %195 {strides = array<i32>} : memref<8x32xf32, #tpu.memory_space<vmem>>, vector<8x32xf32>,
    } else {
    }
    %c0 = arith.constant 0 : index
    %c0_1 = arith.constant 0 : index
    %c0_2 = arith.constant 0 : index
    %3 = vector.load %arg2[%c0, %c0_1, %c0_2] : memref<8x8x4xbf16, #tpu.memory_space<vmem>>, vector<8x8x4xbf16>
    %c0_3 = arith.constant 0 : index
    %c0_4 = arith.constant 0 : index
    %4 = vector.load %arg4[%c0_3, %c0_4] : memref<32x128xbf16, #tpu.memory_space<vmem>>, vector<32x128xbf16>
    %5 = tpu.iota {dimensions = array<i32: 1>} : vector<8x128xi32>
    %c64_i32 = arith.constant 64 : i32
    %6 = vector.broadcast %c64_i32 : i32 to vector<8x128xi32>
    %7 = arith.cmpi sge, %5, %6 : vector<8x128xi32>
    %c96_i32 = arith.constant 96 : i32
    %8 = vector.broadcast %c96_i32 : i32 to vector<8x128xi32>
    %9 = arith.cmpi slt, %5, %8 : vector<8x128xi32>
    %10 = arith.andi %7, %9 : vector<8x128xi1>
    %11 = vector.shape_cast %3 : vector<8x8x4xbf16> to vector<64x4xbf16>
    %c0_5 = arith.constant 0 : index
    %c0_6 = arith.constant 0 : index
    %12 = vector.load %arg3[%c0_5, %c0_6] : memref<4x128xbf16, #tpu.memory_space<vmem>>, vector<4x128xbf16>
    %cst = arith.constant dense<0.000000e+00> : vector<64x128xf32>
    %13 = tpu.matmul %11, %12, %cst {dimension_numbers = #tpu.dot_dimension_numbers<[1], [0], [0], [1], [0, 0, 1, 1], [], []>} : vector<64x4xbf16>, vector<4x128xbf16>, vector<64x128xf32> -> vector<64x128xf32>
    %c0_7 = arith.constant 0 : index
    %c0_8 = arith.constant 0 : index
    %14 = vector.load %arg5[%c0_7, %c0_8] : memref<1x128xf32, #tpu.memory_space<vmem>>, vector<1x128xf32>
    %15 = vector.broadcast %14 : vector<1x128xf32> to vector<64x128xf32>
    %16 = arith.addf %13, %15 : vector<64x128xf32>
    %c0_9 = arith.constant 0 : index
    %c0_10 = arith.constant 0 : index
    %17 = vector.load %arg9[%c0_9, %c0_10] : memref<8x32xf32, #tpu.memory_space<vmem>>, vector<8x32xf32>
    %c0_11 = arith.constant 0 : index
    %c0_12 = arith.constant 0 : index
    %18 = vector.load %arg10[%c0_11, %c0_12] : memref<8x32xf32, #tpu.memory_space<vmem>>, vector<8x32xf32>
    %19 = vector.shape_cast %16 : vector<64x128xf32> to vector<8x8x128xf32>
    %20 = vector.extract_strided_slice %19 {offsets = [0, 0, 0], sizes = [1, 8, 128], strides = [1, 1, 1]} : vector<8x8x128xf32> to vector<1x8x128xf32>
    %21 = vector.shape_cast %20 : vector<1x8x128xf32> to vector<8x128xf32>
    %22 = arith.truncf %17 : vector<8x32xf32> to vector<8x32xbf16>
    %cst_13 = arith.constant dense<0.000000e+00> : vector<8x128xf32>
    %23 = tpu.matmul %22, %4, %cst_13 {dimension_numbers = #tpu.dot_dimension_numbers<[1], [0], [0], [1], [0, 0, 1, 1], [], []>} : vector<8x32xbf16>, vector<32x128xbf16>, vector<8x128xf32> -> vector<8x128xf32>
    %24 = arith.addf %21, %23 : vector<8x128xf32>
    %25 = math.tanh %24 : vector<8x128xf32>
    %26 = arith.negf %24 : vector<8x128xf32>
    %27 = math.exp %26 : vector<8x128xf32>
    %cst_14 = arith.constant 1.000000e+00 : f32
    %28 = vector.broadcast %cst_14 : f32 to vector<8x128xf32>
    %29 = arith.addf %28, %27 : vector<8x128xf32>
    %30 = arith.divf %28, %29 : vector<8x128xf32>
    %31 = arith.select %10, %25, %30 : vector<8x128xi1>, vector<8x128xf32>
    %32 = vector.extract_strided_slice %31 {offsets = [0, 0], sizes = [8, 32], strides = [1, 1]} : vector<8x128xf32> to vector<8x32xf32>
    %33 = vector.extract_strided_slice %31 {offsets = [0, 32], sizes = [8, 32], strides = [1, 1]} : vector<8x128xf32> to vector<8x32xf32>
    %34 = vector.extract_strided_slice %31 {offsets = [0, 64], sizes = [8, 32], strides = [1, 1]} : vector<8x128xf32> to vector<8x32xf32>
    %35 = vector.extract_strided_slice %31 {offsets = [0, 96], sizes = [8, 32], strides = [1, 1]} : vector<8x128xf32> to vector<8x32xf32>
    %36 = arith.mulf %33, %18 : vector<8x32xf32>
    %37 = arith.mulf %32, %34 : vector<8x32xf32>
    %38 = arith.addf %36, %37 : vector<8x32xf32>
    %39 = math.tanh %38 : vector<8x32xf32>
    %40 = arith.mulf %35, %39 : vector<8x32xf32>
    %41 = vector.extract_strided_slice %19 {offsets = [1, 0, 0], sizes = [1, 8, 128], strides = [1, 1, 1]} : vector<8x8x128xf32> to vector<1x8x128xf32>
    %42 = vector.shape_cast %41 : vector<1x8x128xf32> to vector<8x128xf32>
    %43 = arith.truncf %40 : vector<8x32xf32> to vector<8x32xbf16>
    %cst_15 = arith.constant dense<0.000000e+00> : vector<8x128xf32>
    %44 = tpu.matmul %43, %4, %cst_15 {dimension_numbers = #tpu.dot_dimension_numbers<[1], [0], [0], [1], [0, 0, 1, 1], [], []>} : vector<8x32xbf16>, vector<32x128xbf16>, vector<8x128xf32> -> vector<8x128xf32>
    %45 = arith.addf %42, %44 : vector<8x128xf32>
    %46 = math.tanh %45 : vector<8x128xf32>
    %47 = arith.negf %45 : vector<8x128xf32>
    %48 = math.exp %47 : vector<8x128xf32>
    %cst_16 = arith.constant 1.000000e+00 : f32
    %49 = vector.broadcast %cst_16 : f32 to vector<8x128xf32>
    %50 = arith.addf %49, %48 : vector<8x128xf32>
    %51 = arith.divf %49, %50 : vector<8x128xf32>
    %52 = arith.select %10, %46, %51 : vector<8x128xi1>, vector<8x128xf32>
    %53 = vector.extract_strided_slice %52 {offsets = [0, 0], sizes = [8, 32], strides = [1, 1]} : vector<8x128xf32> to vector<8x32xf32>
    %54 = vector.extract_strided_slice %52 {offsets = [0, 32], sizes = [8, 32], strides = [1, 1]} : vector<8x128xf32> to vector<8x32xf32>
    %55 = vector.extract_strided_slice %52 {offsets = [0, 64], sizes = [8, 32], strides = [1, 1]} : vector<8x128xf32> to vector<8x32xf32>
    %56 = vector.extract_strided_slice %52 {offsets = [0, 96], sizes = [8, 32], strides = [1, 1]} : vector<8x128xf32> to vector<8x32xf32>
    %57 = arith.mulf %54, %38 : vector<8x32xf32>
    %58 = arith.mulf %53, %55 : vector<8x32xf32>
    %59 = arith.addf %57, %58 : vector<8x32xf32>
    %60 = math.tanh %59 : vector<8x32xf32>
    %61 = arith.mulf %56, %60 : vector<8x32xf32>
    %62 = vector.extract_strided_slice %19 {offsets = [2, 0, 0], sizes = [1, 8, 128], strides = [1, 1, 1]} : vector<8x8x128xf32> to vector<1x8x128xf32>
    %63 = vector.shape_cast %62 : vector<1x8x128xf32> to vector<8x128xf32>
    %64 = arith.truncf %61 : vector<8x32xf32> to vector<8x32xbf16>
    %cst_17 = arith.constant dense<0.000000e+00> : vector<8x128xf32>
    %65 = tpu.matmul %64, %4, %cst_17 {dimension_numbers = #tpu.dot_dimension_numbers<[1], [0], [0], [1], [0, 0, 1, 1], [], []>} : vector<8x32xbf16>, vector<32x128xbf16>, vector<8x128xf32> -> vector<8x128xf32>
    %66 = arith.addf %63, %65 : vector<8x128xf32>
    %67 = math.tanh %66 : vector<8x128xf32>
    %68 = arith.negf %66 : vector<8x128xf32>
    %69 = math.exp %68 : vector<8x128xf32>
    %cst_18 = arith.constant 1.000000e+00 : f32
    %70 = vector.broadcast %cst_18 : f32 to vector<8x128xf32>
    %71 = arith.addf %70, %69 : vector<8x128xf32>
    %72 = arith.divf %70, %71 : vector<8x128xf32>
    %73 = arith.select %10, %67, %72 : vector<8x128xi1>, vector<8x128xf32>
    %74 = vector.extract_strided_slice %73 {offsets = [0, 0], sizes = [8, 32], strides = [1, 1]} : vector<8x128xf32> to vector<8x32xf32>
    %75 = vector.extract_strided_slice %73 {offsets = [0, 32], sizes = [8, 32], strides = [1, 1]} : vector<8x128xf32> to vector<8x32xf32>
    %76 = vector.extract_strided_slice %73 {offsets = [0, 64], sizes = [8, 32], strides = [1, 1]} : vector<8x128xf32> to vector<8x32xf32>
    %77 = vector.extract_strided_slice %73 {offsets = [0, 96], sizes = [8, 32], strides = [1, 1]} : vector<8x128xf32> to vector<8x32xf32>
    %78 = arith.mulf %75, %59 : vector<8x32xf32>
    %79 = arith.mulf %74, %76 : vector<8x32xf32>
    %80 = arith.addf %78, %79 : vector<8x32xf32>
    %81 = math.tanh %80 : vector<8x32xf32>
    %82 = arith.mulf %77, %81 : vector<8x32xf32>
    %83 = vector.extract_strided_slice %19 {offsets = [3, 0, 0], sizes = [1, 8, 128], strides = [1, 1, 1]} : vector<8x8x128xf32> to vector<1x8x128xf32>
    %84 = vector.shape_cast %83 : vector<1x8x128xf32> to vector<8x128xf32>
    %85 = arith.truncf %82 : vector<8x32xf32> to vector<8x32xbf16>
    %cst_19 = arith.constant dense<0.000000e+00> : vector<8x128xf32>
    %86 = tpu.matmul %85, %4, %cst_19 {dimension_numbers = #tpu.dot_dimension_numbers<[1], [0], [0], [1], [0, 0, 1, 1], [], []>} : vector<8x32xbf16>, vector<32x128xbf16>, vector<8x128xf32> -> vector<8x128xf32>
    %87 = arith.addf %84, %86 : vector<8x128xf32>
    %88 = math.tanh %87 : vector<8x128xf32>
    %89 = arith.negf %87 : vector<8x128xf32>
    %90 = math.exp %89 : vector<8x128xf32>
    %cst_20 = arith.constant 1.000000e+00 : f32
    %91 = vector.broadcast %cst_20 : f32 to vector<8x128xf32>
    %92 = arith.addf %91, %90 : vector<8x128xf32>
    %93 = arith.divf %91, %92 : vector<8x128xf32>
    %94 = arith.select %10, %88, %93 : vector<8x128xi1>, vector<8x128xf32>
    %95 = vector.extract_strided_slice %94 {offsets = [0, 0], sizes = [8, 32], strides = [1, 1]} : vector<8x128xf32> to vector<8x32xf32>
    %96 = vector.extract_strided_slice %94 {offsets = [0, 32], sizes = [8, 32], strides = [1, 1]} : vector<8x128xf32> to vector<8x32xf32>
    %97 = vector.extract_strided_slice %94 {offsets = [0, 64], sizes = [8, 32], strides = [1, 1]} : vector<8x128xf32> to vector<8x32xf32>
    %98 = vector.extract_strided_slice %94 {offsets = [0, 96], sizes = [8, 32], strides = [1, 1]} : vector<8x128xf32> to vector<8x32xf32>
    %99 = arith.mulf %96, %80 : vector<8x32xf32>
    %100 = arith.mulf %95, %97 : vector<8x32xf32>
    %101 = arith.addf %99, %100 : vector<8x32xf32>
    %102 = math.tanh %101 : vector<8x32xf32>
    %103 = arith.mulf %98, %102 : vector<8x32xf32>
    %104 = vector.extract_strided_slice %19 {offsets = [4, 0, 0], sizes = [1, 8, 128], strides = [1, 1, 1]} : vector<8x8x128xf32> to vector<1x8x128xf32>
    %105 = vector.shape_cast %104 : vector<1x8x128xf32> to vector<8x128xf32>
    %106 = arith.truncf %103 : vector<8x32xf32> to vector<8x32xbf16>
    %cst_21 = arith.constant dense<0.000000e+00> : vector<8x128xf32>
    %107 = tpu.matmul %106, %4, %cst_21 {dimension_numbers = #tpu.dot_dimension_numbers<[1], [0], [0], [1], [0, 0, 1, 1], [], []>} : vector<8x32xbf16>, vector<32x128xbf16>, vector<8x128xf32> -> vector<8x128xf32>
    %108 = arith.addf %105, %107 : vector<8x128xf32>
    %109 = math.tanh %108 : vector<8x128xf32>
    %110 = arith.negf %108 : vector<8x128xf32>
    %111 = math.exp %110 : vector<8x128xf32>
    %cst_22 = arith.constant 1.000000e+00 : f32
    %112 = vector.broadcast %cst_22 : f32 to vector<8x128xf32>
    %113 = arith.addf %112, %111 : vector<8x128xf32>
    %114 = arith.divf %112, %113 : vector<8x128xf32>
    %115 = arith.select %10, %109, %114 : vector<8x128xi1>, vector<8x128xf32>
    %116 = vector.extract_strided_slice %115 {offsets = [0, 0], sizes = [8, 32], strides = [1, 1]} : vector<8x128xf32> to vector<8x32xf32>
    %117 = vector.extract_strided_slice %115 {offsets = [0, 32], sizes = [8, 32], strides = [1, 1]} : vector<8x128xf32> to vector<8x32xf32>
    %118 = vector.extract_strided_slice %115 {offsets = [0, 64], sizes = [8, 32], strides = [1, 1]} : vector<8x128xf32> to vector<8x32xf32>
    %119 = vector.extract_strided_slice %115 {offsets = [0, 96], sizes = [8, 32], strides = [1, 1]} : vector<8x128xf32> to vector<8x32xf32>
    %120 = arith.mulf %117, %101 : vector<8x32xf32>
    %121 = arith.mulf %116, %118 : vector<8x32xf32>
    %122 = arith.addf %120, %121 : vector<8x32xf32>
    %123 = math.tanh %122 : vector<8x32xf32>
    %124 = arith.mulf %119, %123 : vector<8x32xf32>
    %125 = vector.extract_strided_slice %19 {offsets = [5, 0, 0], sizes = [1, 8, 128], strides = [1, 1, 1]} : vector<8x8x128xf32> to vector<1x8x128xf32>
    %126 = vector.shape_cast %125 : vector<1x8x128xf32> to vector<8x128xf32>
    %127 = arith.truncf %124 : vector<8x32xf32> to vector<8x32xbf16>
    %cst_23 = arith.constant dense<0.000000e+00> : vector<8x128xf32>
    %128 = tpu.matmul %127, %4, %cst_23 {dimension_numbers = #tpu.dot_dimension_numbers<[1], [0], [0], [1], [0, 0, 1, 1], [], []>} : vector<8x32xbf16>, vector<32x128xbf16>, vector<8x128xf32> -> vector<8x128xf32>
    %129 = arith.addf %126, %128 : vector<8x128xf32>
    %130 = math.tanh %129 : vector<8x128xf32>
    %131 = arith.negf %129 : vector<8x128xf32>
    %132 = math.exp %131 : vector<8x128xf32>
    %cst_24 = arith.constant 1.000000e+00 : f32
    %133 = vector.broadcast %cst_24 : f32 to vector<8x128xf32>
    %134 = arith.addf %133, %132 : vector<8x128xf32>
    %135 = arith.divf %133, %134 : vector<8x128xf32>
    %136 = arith.select %10, %130, %135 : vector<8x128xi1>, vector<8x128xf32>
    %137 = vector.extract_strided_slice %136 {offsets = [0, 0], sizes = [8, 32], strides = [1, 1]} : vector<8x128xf32> to vector<8x32xf32>
    %138 = vector.extract_strided_slice %136 {offsets = [0, 32], sizes = [8, 32], strides = [1, 1]} : vector<8x128xf32> to vector<8x32xf32>
    %139 = vector.extract_strided_slice %136 {offsets = [0, 64], sizes = [8, 32], strides = [1, 1]} : vector<8x128xf32> to vector<8x32xf32>
    %140 = vector.extract_strided_slice %136 {offsets = [0, 96], sizes = [8, 32], strides = [1, 1]} : vector<8x128xf32> to vector<8x32xf32>
    %141 = arith.mulf %138, %122 : vector<8x32xf32>
    %142 = arith.mulf %137, %139 : vector<8x32xf32>
    %143 = arith.addf %141, %142 : vector<8x32xf32>
    %144 = math.tanh %143 : vector<8x32xf32>
    %145 = arith.mulf %140, %144 : vector<8x32xf32>
    %146 = vector.extract_strided_slice %19 {offsets = [6, 0, 0], sizes = [1, 8, 128], strides = [1, 1, 1]} : vector<8x8x128xf32> to vector<1x8x128xf32>
    %147 = vector.shape_cast %146 : vector<1x8x128xf32> to vector<8x128xf32>
    %148 = arith.truncf %145 : vector<8x32xf32> to vector<8x32xbf16>
    %cst_25 = arith.constant dense<0.000000e+00> : vector<8x128xf32>
    %149 = tpu.matmul %148, %4, %cst_25 {dimension_numbers = #tpu.dot_dimension_numbers<[1], [0], [0], [1], [0, 0, 1, 1], [], []>} : vector<8x32xbf16>, vector<32x128xbf16>, vector<8x128xf32> -> vector<8x128xf32>
    %150 = arith.addf %147, %149 : vector<8x128xf32>
    %151 = math.tanh %150 : vector<8x128xf32>
    %152 = arith.negf %150 : vector<8x128xf32>
    %153 = math.exp %152 : vector<8x128xf32>
    %cst_26 = arith.constant 1.000000e+00 : f32
    %154 = vector.broadcast %cst_26 : f32 to vector<8x128xf32>
    %155 = arith.addf %154, %153 : vector<8x128xf32>
    %156 = arith.divf %154, %155 : vector<8x128xf32>
    %157 = arith.select %10, %151, %156 : vector<8x128xi1>, vector<8x128xf32>
    %158 = vector.extract_strided_slice %157 {offsets = [0, 0], sizes = [8, 32], strides = [1, 1]} : vector<8x128xf32> to vector<8x32xf32>
    %159 = vector.extract_strided_slice %157 {offsets = [0, 32], sizes = [8, 32], strides = [1, 1]} : vector<8x128xf32> to vector<8x32xf32>
    %160 = vector.extract_strided_slice %157 {offsets = [0, 64], sizes = [8, 32], strides = [1, 1]} : vector<8x128xf32> to vector<8x32xf32>
    %161 = vector.extract_strided_slice %157 {offsets = [0, 96], sizes = [8, 32], strides = [1, 1]} : vector<8x128xf32> to vector<8x32xf32>
    %162 = arith.mulf %159, %143 : vector<8x32xf32>
    %163 = arith.mulf %158, %160 : vector<8x32xf32>
    %164 = arith.addf %162, %163 : vector<8x32xf32>
    %165 = math.tanh %164 : vector<8x32xf32>
    %166 = arith.mulf %161, %165 : vector<8x32xf32>
    %167 = vector.extract_strided_slice %19 {offsets = [7, 0, 0], sizes = [1, 8, 128], strides = [1, 1, 1]} : vector<8x8x128xf32> to vector<1x8x128xf32>
    %168 = vector.shape_cast %167 : vector<1x8x128xf32> to vector<8x128xf32>
    %169 = arith.truncf %166 : vector<8x32xf32> to vector<8x32xbf16>
    %cst_27 = arith.constant dense<0.000000e+00> : vector<8x128xf32>
    %170 = tpu.matmul %169, %4, %cst_27 {dimension_numbers = #tpu.dot_dimension_numbers<[1], [0], [0], [1], [0, 0, 1, 1], [], []>} : vector<8x32xbf16>, vector<32x128xbf16>, vector<8x128xf32> -> vector<8x128xf32>
    %171 = arith.addf %168, %170 : vector<8x128xf32>
    %172 = math.tanh %171 : vector<8x128xf32>
    %173 = arith.negf %171 : vector<8x128xf32>
    %174 = math.exp %173 : vector<8x128xf32>
    %cst_28 = arith.constant 1.000000e+00 : f32
    %175 = vector.broadcast %cst_28 : f32 to vector<8x128xf32>
    %176 = arith.addf %175, %174 : vector<8x128xf32>
    %177 = arith.divf %175, %176 : vector<8x128xf32>
    %178 = arith.select %10, %172, %177 : vector<8x128xi1>, vector<8x128xf32>
    %179 = vector.extract_strided_slice %178 {offsets = [0, 0], sizes = [8, 32], strides = [1, 1]} : vector<8x128xf32> to vector<8x32xf32>
    %180 = vector.extract_strided_slice %178 {offsets = [0, 32], sizes = [8, 32], strides = [1, 1]} : vector<8x128xf32> to vector<8x32xf32>
    %181 = vector.extract_strided_slice %178 {offsets = [0, 64], sizes = [8, 32], strides = [1, 1]} : vector<8x128xf32> to vector<8x32xf32>
    %182 = vector.extract_strided_slice %178 {offsets = [0, 96], sizes = [8, 32], strides = [1, 1]} : vector<8x128xf32> to vector<8x32xf32>
    %183 = arith.mulf %180, %164 : vector<8x32xf32>
    %184 = arith.mulf %179, %181 : vector<8x32xf32>
    %185 = arith.addf %183, %184 : vector<8x32xf32>
    %186 = math.tanh %185 : vector<8x32xf32>
    %187 = arith.mulf %182, %186 : vector<8x32xf32>
    %c0_29 = arith.constant 0 : index
    %c0_30 = arith.constant 0 : index
    %188 = vector.load %arg9[%c0_29, %c0_30] : memref<8x32xf32, #tpu.memory_space<vmem>>, vector<8x32xf32>
    tpu.vector_store %arg9[%c0_29, %c0_30], %187 {strides = array<i32>} : memref<8x32xf32, #tpu.memory_space<vmem>>, vector<8x32xf32>,
    %c0_31 = arith.constant 0 : index
    %c0_32 = arith.constant 0 : index
    %189 = vector.load %arg10[%c0_31, %c0_32] : memref<8x32xf32, #tpu.memory_space<vmem>>, vector<8x32xf32>
    tpu.vector_store %arg10[%c0_31, %c0_32], %185 {strides = array<i32>} : memref<8x32xf32, #tpu.memory_space<vmem>>, vector<8x32xf32>,
    %c0_i32_33 = arith.constant 0 : i32
    %190 = arith.cmpi eq, %arg1, %c0_i32_33 : i32
    %191 = arith.extui %190 : i1 to i32
    %c0_i32_34 = arith.constant 0 : i32
    %192 = arith.cmpi ne, %191, %c0_i32_34 : i32
    scf.if %192 {
      %c0_35 = arith.constant 0 : index
      %c0_36 = arith.constant 0 : index
      %193 = vector.load %arg6[%c0_35, %c0_36] : memref<32x1xf32, #tpu.memory_space<vmem>>, vector<32x1xf32>
      %cst_37 = arith.constant dense<0.000000e+00> : vector<8x1xf32>
      %194 = tpu.matmul %187, %193, %cst_37 {dimension_numbers = #tpu.dot_dimension_numbers<[1], [0], [0], [1], [0, 0, 1, 1], [], []>} : vector<8x32xf32>, vector<32x1xf32>, vector<8x1xf32> -> vector<8x1xf32>
      %c0_38 = arith.constant 0 : index
      %c0_39 = arith.constant 0 : index
      %195 = vector.load %arg7[%c0_38, %c0_39] : memref<1x1xf32, #tpu.memory_space<vmem>>, vector<1x1xf32>
      %196 = vector.broadcast %195 : vector<1x1xf32> to vector<8x1xf32>
      %197 = arith.addf %194, %196 : vector<8x1xf32>
      %c0_40 = arith.constant 0 : index
      %c0_41 = arith.constant 0 : index
      %198 = vector.load %arg8[%c0_40, %c0_41] : memref<8x1xf32, #tpu.memory_space<vmem>>, vector<8x1xf32>
      tpu.vector_store %arg8[%c0_40, %c0_41], %197 {strides = array<i32>} : memref<8x1xf32, #tpu.memory_space<vmem>>, vector<8x1xf32>,
    } else {
    }
    return
  }
  func.func @transform_0(%arg0: i32, %arg1: i32) -> (i32, i32, i32) {
    %c0_i32 = arith.constant 0 : i32
    %c0_i32_0 = arith.constant 0 : i32
    return %arg1, %arg0, %c0_i32 : i32, i32, i32
  }
  func.func @transform_1(%arg0: i32, %arg1: i32) -> (i32, i32) {
    %c0_i32 = arith.constant 0 : i32
    %c0_i32_0 = arith.constant 0 : i32
    %c0_i32_1 = arith.constant 0 : i32
    return %c0_i32, %c0_i32_0 : i32, i32
  }
  func.func @transform_2(%arg0: i32, %arg1: i32) -> (i32, i32) {
    %c0_i32 = arith.constant 0 : i32
    %c0_i32_0 = arith.constant 0 : i32
    %c0_i32_1 = arith.constant 0 : i32
    return %c0_i32, %c0_i32_0 : i32, i32
  }
  func.func @transform_3(%arg0: i32, %arg1: i32) -> (i32, i32) {
    %c0_i32 = arith.constant 0 : i32
    %c0_i32_0 = arith.constant 0 : i32
    %c0_i32_1 = arith.constant 0 : i32
    return %c0_i32, %c0_i32_0 : i32, i32
  }
  func.func @transform_4(%arg0: i32, %arg1: i32) -> (i32, i32) {
    %c0_i32 = arith.constant 0 : i32
    %c0_i32_0 = arith.constant 0 : i32
    %c0_i32_1 = arith.constant 0 : i32
    return %c0_i32, %c0_i32_0 : i32, i32
  }
  func.func @transform_5(%arg0: i32, %arg1: i32) -> (i32, i32) {
    %c0_i32 = arith.constant 0 : i32
    %c0_i32_0 = arith.constant 0 : i32
    %c0_i32_1 = arith.constant 0 : i32
    return %c0_i32, %c0_i32_0 : i32, i32
  }
  func.func @transform_6(%arg0: i32, %arg1: i32) -> (i32, i32) {
    %c0_i32 = arith.constant 0 : i32
    %c0_i32_0 = arith.constant 0 : i32
    return %arg0, %c0_i32 : i32, i32
  }
}

</mosaic_0001>

<llo_original>
// kernel: tpu_custom_call.1
$region0: #{tpu_custom_call.1}
  #allocation0 [shape = 'u32[]', space=smem, size = 0x4, offset = 0x4, fixed_abs, tag = 'smem constant byte address 0x4 - core index']
  #allocation1 [shape = 'u32[72,128]{1,0:T(1,128)}', space=vmem, size = 0x9000, scoped, tag = 'internal scratch']
  #allocation2 [shape = 'f32[8,32]{1,0:T(8,128)}', space=vmem, size = 0x1000, scoped, tag = 'scratch operand']
  #allocation3 [shape = 'f32[8,32]{1,0:T(8,128)}', space=vmem, size = 0x1000, scoped, tag = 'scratch operand']
  #allocation4 [shape = 'f32[1,1]{1,0:T(1,128)S(1)}', space=vmem, size = 0x200, scoped, tag = 'scoped memory for tpu_custom_call.1']
  %s0 = inlined_call_operand.vmem [shape: bf16[8,8,4], index: 0, kind: input, shape index: {}]
  %s1 = inlined_call_operand.vmem [shape: bf16[4,128], index: 1, kind: input, shape index: {}]
  %s2 = inlined_call_operand.vmem [shape: bf16[32,128], index: 2, kind: input, shape index: {}]
  %s3 = inlined_call_operand.vmem [shape: f32[1,128], index: 3, kind: input, shape index: {}]
  %s4 = inlined_call_operand.vmem [shape: f32[32,1], index: 4, kind: input, shape index: {}]
  %s5 = inlined_call_operand.<no memory space> [shape: f32[1,1], index: 5, kind: input, shape index: {}]
  %s6 = inlined_call_operand.vmem [shape: f32[8,1], index: 6, kind: output, shape index: {}]
  %s7 = sld [smem:[#allocation0]]
  $region42: #{tpu_custom_call.1} parent=0
    _
  %s9 = ssub.s32 1, %s7
  %s10 = scalar_select 0, %s9, %s7
  %v11 = vstv %s5
  %12 = vst [vmem:[#allocation4] sm:$0x1] %v11
  // Predicated region
  $region2: #{tpu_custom_call.1} parent=0 // pred_check
    _
  $region3: #{tpu_custom_call.1} parent=0 // pred_check_branch
    %14 = sbr.rel (0) target = $region5
  $region4: #{tpu_custom_call.1} parent=0 // pred_region
    _
  $region5: #{tpu_custom_call.1} parent=0 // pred_fallthru
    _
  // Predicated region
  $region6: #{tpu_custom_call.1} parent=0 // pred_check
    _
  $region7: #{tpu_custom_call.1} parent=0 // pred_check_branch
    %16 = sbr.rel (0) target = $region9
  $region8: #{tpu_custom_call.1} parent=0 // pred_region
    _
  $region9: #{tpu_custom_call.1} parent=0 // pred_fallthru
    _
  // Predicated region
  $region10: #{tpu_custom_call.1} parent=0 // pred_check
    _
  $region11: #{tpu_custom_call.1} parent=0 // pred_check_branch
    %18 = sbr.rel (0) target = $region13
  $region12: #{tpu_custom_call.1} parent=0 // pred_region
    _
  $region13: #{tpu_custom_call.1} parent=0 // pred_fallthru
    _
  // Predicated region
  $region14: #{tpu_custom_call.1} parent=0 // pred_check
    _
  $region15: #{tpu_custom_call.1} parent=0 // pred_check_branch
    %20 = sbr.rel (0) target = $region17
  $region16: #{tpu_custom_call.1} parent=0 // pred_region
    _
  $region17: #{tpu_custom_call.1} parent=0 // pred_fallthru
    _
  // Predicated region
  $region18: #{tpu_custom_call.1} parent=0 // pred_check
    _
  $region19: #{tpu_custom_call.1} parent=0 // pred_check_branch
    %22 = sbr.rel (0) target = $region21
  $region20: #{tpu_custom_call.1} parent=0 // pred_region
    _
  $region21: #{tpu_custom_call.1} parent=0 // pred_fallthru
    _
  // Predicated region
  $region22: #{tpu_custom_call.1} parent=0 // pred_check
    _
  $region23: #{tpu_custom_call.1} parent=0 // pred_check_branch
    %24 = sbr.rel (0) target = $region25
  $region24: #{tpu_custom_call.1} parent=0 // pred_region
    _
  $region25: #{tpu_custom_call.1} parent=0 // pred_fallthru
    _
  %p26 = scmp.eq.s32.totalorder 0, 0
  // Predicated region
  $region26: #{tpu_custom_call.1} parent=0 // pred_check
    %p27 = pneg %p26
  $region27: #{tpu_custom_call.1} parent=0 // pred_check_branch
    %29 = sbr.rel (%p27) target = $region29
  $region28: #{tpu_custom_call.1} parent=0 // pred_region
    %vm30 = vcmask 261120
    %31 = vst.msk [vmem:[#allocation2] sm:$0xff] %vm30, 0.0
    %32 = vst.msk [vmem:[#allocation3] sm:$0xff] %vm30, 0.0
  $region29: #{tpu_custom_call.1} parent=0 // pred_fallthru
    _
  %v33 = vld [vmem:[%s0] sm:$0xf]
  %v34 = vld [vmem:[%s0 + $0x4] sm:$0xf]
  %v35 = vld [vmem:[%s0 + $0x8] sm:$0xf]
  %v36 = vld [vmem:[%s0 + $0xc] sm:$0xf]
  %v37 = vld [vmem:[%s0 + $0x10] sm:$0xf]
  %v38 = vld [vmem:[%s0 + $0x14] sm:$0xf]
  %v39 = vld [vmem:[%s0 + $0x18] sm:$0xf]
  %v40 = vld [vmem:[%s0 + $0x1c] sm:$0xf]
  %v41 = vld [vmem:[%s2] sm:$0xf]
  %v42 = vld [vmem:[%s2 + $0x4] sm:$0xf]
  %v43 = vld [vmem:[%s2 + $0x8] sm:$0xf]
  %v44 = vld [vmem:[%s2 + $0xc] sm:$0xf]
  %v45 = vlaneseq
  %v46 = vand.u32 %v45, 127
  %vm47 = vcmp.ge.s32.totalorder %v46, 64
  %vm48 = vcmp.lt.s32.totalorder %v46, 96
  %vm49 = vmand %vm47, %vm48
  %v50 = vld [vmem:[%s1] sm:$0x3]
  %v51 = vld [vmem:[%s3] sm:$0x1]
  %v53 = vperm.slane %v51, 0
  %v63 = vunpack.c.l.b16 %v33
  %v64 = vunpack.c.l.b16 %v34
  %v65 = vunpack.c.l.b16 %v35
  %v66 = vunpack.c.l.b16 %v36
  %v67 = vunpack.c.l.b16 %v37
  %v68 = vunpack.c.l.b16 %v38
  %v69 = vunpack.c.l.b16 %v39
  %v70 = vunpack.c.l.b16 %v40
  %v71 = vpack.c.b16 %v64, %v63
  %v72 = vpack.c.b16 %v66, %v65
  %v73 = vpack.c.b16 %v68, %v67
  %v74 = vpack.c.b16 %v70, %v69
  %vm75 = vcmask 31744
  %v77 = vsel %vm75, %v71, 0
  %v80 = vsel %vm75, %v72, 0
  %v83 = vsel %vm75, %v73, 0
  %v86 = vsel %vm75, %v74, 0
  %vm88 = vcmask 1041408
  %v90 = vsel %vm88, %v50, 0
  %92 = vmatpush.bf16.msra.mxu0 0
  %93 = vmatpush.bf16.msra.mxu0 0
  %94 = vmatpush.bf16.msra.mxu0 0
  %95 = vmatpush.bf16.msra.mxu0 0
  %96 = vmatpush.bf16.msra.mxu0 0
  %97 = vmatpush.bf16.msra.mxu0 0
  %98 = vmatpush.bf16.msra.mxu0 0
  %99 = vmatpush.bf16.msra.mxu0 %v90
  %100 = vmatmul.bf16.gmra.mxu0 %v77
  %v101 = vpop.f32.mrf.mxu0
  %v102 = vadd.f32 %v53, %v101
  %v103 = vpop.f32.mrf.mxu0
  %v104 = vadd.f32 %v53, %v103
  %105 = vmatmul.bf16.gmra.mxu0 %v80
  %v106 = vpop.f32.mrf.mxu0
  %v107 = vadd.f32 %v53, %v106
  %v108 = vpop.f32.mrf.mxu0
  %v109 = vadd.f32 %v53, %v108
  %110 = vmatmul.bf16.gmra.mxu0 %v83
  %v111 = vpop.f32.mrf.mxu0
  %v112 = vadd.f32 %v53, %v111
  %v113 = vpop.f32.mrf.mxu0
  %v114 = vadd.f32 %v53, %v113
  %115 = vmatmul.bf16.gmra.mxu0 %v86
  %v116 = vpop.f32.mrf.mxu0
  %v117 = vadd.f32 %v53, %v116
  %v118 = vpop.f32.mrf.mxu0
  %v119 = vadd.f32 %v53, %v118
  %120 = vdwg.mxu0
  %v121 = vld [vmem:[#allocation2] sm:$0xff]
  %v122 = vld [vmem:[#allocation3] sm:$0xff]
  %v123 = vpack.c.bf16 %v121, %v121
  %v128 = vunpack.c.l.b16 %v41
  %v129 = vunpack.c.l.b16 %v42
  %v130 = vunpack.c.l.b16 %v43
  %v131 = vunpack.c.l.b16 %v44
  %v132 = vpack.c.b16 %v129, %v128
  %v133 = vpack.c.b16 %v131, %v130
  %vm136 = vcmask 261120
  %v138 = vsel %vm136, %v123, 0
  %140 = vmatpush.bf16.msra.mxu0 0
  %141 = vmatpush.bf16.msra.mxu0 0
  %142 = vmatpush.bf16.msra.mxu0 0
  %143 = vmatpush.bf16.msra.mxu0 0
  %144 = vmatpush.bf16.msra.mxu0 0
  %145 = vmatpush.bf16.msra.mxu0 0
  %146 = vmatpush.bf16.msra.mxu0 %v133
  %147 = vmatpush.bf16.msra.mxu0 %v132
  %148 = vmatmul.bf16.gmra.mxu0 %v138
  %v149 = vpop.f32.mrf.mxu0
  %v150 = vadd.f32 0.0, %v149
  %v151 = vpop.f32.mrf.mxu0
  %152 = vdwg.mxu0
  %v153 = vadd.f32 %v102, %v150
  %v154 = vtanh.pop %v153
  %v155 = vxor.u32 %v153, 2147483648
  %v156 = vmul.f32 %v155, 1.442695
  %v157 = vpow.pop %v156
  %v158 = vadd.f32 %v157, 1.0
  %v159 = vrcp.pop %v158
  %v160 = vmul.f32 %v158, %v159
  %v161 = vsub.f32 1.0, %v160
  %v162 = vmul.f32 %v159, %v161
  %v163 = vadd.f32 %v159, %v162
  %vm164 = vweird.f32 %v158
  %vm165 = vweird.f32 %v159
  %vm166 = vmor %vm164, %vm165
  %v167 = vsel %vm166, %v159, %v163
  %v168 = vand.u32 2147483647, %v158
  %vm169 = vcmp.eq.f32.partialorder %v168, 8.507059e+37
  %v170 = vand.u32 %v158, 2147483648
  %v171 = vor.u32 1.1754944e-38, %v170
  %v172 = vsel %vm169, %v171, %v167
  %v173 = vmul.f32 1.0, %v172
  %v174 = vsel %vm49, %v154, %v173
  %176 = vrot.lane.b32.xlu0 %v122, 32
  %v177 = vpop.permute.xlu0 %176
  %v179 = vmul.f32 %v174, %v177
  %181 = vrot.lane.b32.xlu0 %v174, 64
  %v182 = vpop.permute.xlu0 %181
  %v184 = vmul.f32 %v174, %v182
  %186 = vrot.lane.b32.xlu0 %v184, 32
  %v187 = vpop.permute.xlu0 %186
  %v189 = vadd.f32 %v179, %v187
  %v190 = vtanh.pop %v189
  %192 = vrot.lane.b32.xlu0 %v190, 64
  %v193 = vpop.permute.xlu0 %192
  %v195 = vmul.f32 %v174, %v193
  %v196 = vpack.c.bf16 %v195, %v195
  %198 = vrot.lane.b32.xlu0 %v196, 32
  %v199 = vpop.permute.xlu0 %198
  %v201 = vsel %vm136, %v199, 0
  %203 = vmatpush.bf16.msra.mxu0 0
  %204 = vmatpush.bf16.msra.mxu0 0
  %205 = vmatpush.bf16.msra.mxu0 0
  %206 = vmatpush.bf16.msra.mxu0 0
  %207 = vmatpush.bf16.msra.mxu0 0
  %208 = vmatpush.bf16.msra.mxu0 0
  %209 = vmatpush.bf16.msra.mxu0 %v133
  %210 = vmatpush.bf16.msra.mxu0 %v132
  %211 = vmatmul.bf16.gmra.mxu0 %v201
  %v212 = vpop.f32.mrf.mxu0
  %v213 = vadd.f32 0.0, %v212
  %v214 = vpop.f32.mrf.mxu0
  %215 = vdwg.mxu0
  %v216 = vadd.f32 %v104, %v213
  %v217 = vtanh.pop %v216
  %v218 = vxor.u32 %v216, 2147483648
  %v219 = vmul.f32 %v218, 1.442695
  %v220 = vpow.pop %v219
  %v221 = vadd.f32 %v220, 1.0
  %v222 = vrcp.pop %v221
  %v223 = vmul.f32 %v221, %v222
  %v224 = vsub.f32 1.0, %v223
  %v225 = vmul.f32 %v222, %v224
  %v226 = vadd.f32 %v222, %v225
  %vm227 = vweird.f32 %v221
  %vm228 = vweird.f32 %v222
  %vm229 = vmor %vm227, %vm228
  %v230 = vsel %vm229, %v222, %v226
  %v231 = vand.u32 2147483647, %v221
  %vm232 = vcmp.eq.f32.partialorder %v231, 8.507059e+37
  %v233 = vand.u32 %v221, 2147483648
  %v234 = vor.u32 1.1754944e-38, %v233
  %v235 = vsel %vm232, %v234, %v230
  %v236 = vmul.f32 1.0, %v235
  %v237 = vsel %vm49, %v217, %v236
  %v238 = vmul.f32 %v237, %v189
  %240 = vrot.lane.b32.xlu0 %v237, 64
  %v241 = vpop.permute.xlu0 %240
  %v243 = vmul.f32 %v237, %v241
  %245 = vrot.lane.b32.xlu0 %v243, 32
  %v246 = vpop.permute.xlu0 %245
  %v248 = vadd.f32 %v238, %v246
  %v249 = vtanh.pop %v248
  %251 = vrot.lane.b32.xlu0 %v249, 64
  %v252 = vpop.permute.xlu0 %251
  %v254 = vmul.f32 %v237, %v252
  %v255 = vpack.c.bf16 %v254, %v254
  %257 = vrot.lane.b32.xlu0 %v255, 32
  %v258 = vpop.permute.xlu0 %257
  %v260 = vsel %vm136, %v258, 0
  %262 = vmatpush.bf16.msra.mxu0 0
  %263 = vmatpush.bf16.msra.mxu0 0
  %264 = vmatpush.bf16.msra.mxu0 0
  %265 = vmatpush.bf16.msra.mxu0 0
  %266 = vmatpush.bf16.msra.mxu0 0
  %267 = vmatpush.bf16.msra.mxu0 0
  %268 = vmatpush.bf16.msra.mxu0 %v133
  %269 = vmatpush.bf16.msra.mxu0 %v132
  %270 = vmatmul.bf16.gmra.mxu0 %v260
  %v271 = vpop.f32.mrf.mxu0
  %v272 = vadd.f32 0.0, %v271
  %v273 = vpop.f32.mrf.mxu0
  %274 = vdwg.mxu0
  %v275 = vadd.f32 %v107, %v272
  %v276 = vtanh.pop %v275
  %v277 = vxor.u32 %v275, 2147483648
  %v278 = vmul.f32 %v277, 1.442695
  %v279 = vpow.pop %v278
  %v280 = vadd.f32 %v279, 1.0
  %v281 = vrcp.pop %v280
  %v282 = vmul.f32 %v280, %v281
  %v283 = vsub.f32 1.0, %v282
  %v284 = vmul.f32 %v281, %v283
  %v285 = vadd.f32 %v281, %v284
  %vm286 = vweird.f32 %v280
  %vm287 = vweird.f32 %v281
  %vm288 = vmor %vm286, %vm287
  %v289 = vsel %vm288, %v281, %v285
  %v290 = vand.u32 2147483647, %v280
  %vm291 = vcmp.eq.f32.partialorder %v290, 8.507059e+37
  %v292 = vand.u32 %v280, 2147483648
  %v293 = vor.u32 1.1754944e-38, %v292
  %v294 = vsel %vm291, %v293, %v289
  %v295 = vmul.f32 1.0, %v294
  %v296 = vsel %vm49, %v276, %v295
  %v297 = vmul.f32 %v296, %v248
  %299 = vrot.lane.b32.xlu0 %v296, 64
  %v300 = vpop.permute.xlu0 %299
  %v302 = vmul.f32 %v296, %v300
  %304 = vrot.lane.b32.xlu0 %v302, 32
  %v305 = vpop.permute.xlu0 %304
  %v307 = vadd.f32 %v297, %v305
  %v308 = vtanh.pop %v307
  %310 = vrot.lane.b32.xlu0 %v308, 64
  %v311 = vpop.permute.xlu0 %310
  %v313 = vmul.f32 %v296, %v311
  %v314 = vpack.c.bf16 %v313, %v313
  %316 = vrot.lane.b32.xlu0 %v314, 32
  %v317 = vpop.permute.xlu0 %316
  %v319 = vsel %vm136, %v317, 0
  %321 = vmatpush.bf16.msra.mxu0 0
  %322 = vmatpush.bf16.msra.mxu0 0
  %323 = vmatpush.bf16.msra.mxu0 0
  %324 = vmatpush.bf16.msra.mxu0 0
  %325 = vmatpush.bf16.msra.mxu0 0
  %326 = vmatpush.bf16.msra.mxu0 0
  %327 = vmatpush.bf16.msra.mxu0 %v133
  %328 = vmatpush.bf16.msra.mxu0 %v132
  %329 = vmatmul.bf16.gmra.mxu0 %v319
  %v330 = vpop.f32.mrf.mxu0
  %v331 = vadd.f32 0.0, %v330
  %v332 = vpop.f32.mrf.mxu0
  %333 = vdwg.mxu0
  %v334 = vadd.f32 %v109, %v331
  %v335 = vtanh.pop %v334
  %v336 = vxor.u32 %v334, 2147483648
  %v337 = vmul.f32 %v336, 1.442695
  %v338 = vpow.pop %v337
  %v339 = vadd.f32 %v338, 1.0
  %v340 = vrcp.pop %v339
  %v341 = vmul.f32 %v339, %v340
  %v342 = vsub.f32 1.0, %v341
  %v343 = vmul.f32 %v340, %v342
  %v344 = vadd.f32 %v340, %v343
  %vm345 = vweird.f32 %v339
  %vm346 = vweird.f32 %v340
  %vm347 = vmor %vm345, %vm346
  %v348 = vsel %vm347, %v340, %v344
  %v349 = vand.u32 2147483647, %v339
  %vm350 = vcmp.eq.f32.partialorder %v349, 8.507059e+37
  %v351 = vand.u32 %v339, 2147483648
  %v352 = vor.u32 1.1754944e-38, %v351
  %v353 = vsel %vm350, %v352, %v348
  %v354 = vmul.f32 1.0, %v353
  %v355 = vsel %vm49, %v335, %v354
  %v356 = vmul.f32 %v355, %v307
  %358 = vrot.lane.b32.xlu0 %v355, 64
  %v359 = vpop.permute.xlu0 %358
  %v361 = vmul.f32 %v355, %v359
  %363 = vrot.lane.b32.xlu0 %v361, 32
  %v364 = vpop.permute.xlu0 %363
  %v366 = vadd.f32 %v356, %v364
  %v367 = vtanh.pop %v366
  %369 = vrot.lane.b32.xlu0 %v367, 64
  %v370 = vpop.permute.xlu0 %369
  %v372 = vmul.f32 %v355, %v370
  %v373 = vpack.c.bf16 %v372, %v372
  %375 = vrot.lane.b32.xlu0 %v373, 32
  %v376 = vpop.permute.xlu0 %375
  %v378 = vsel %vm136, %v376, 0
  %380 = vmatpush.bf16.msra.mxu0 0
  %381 = vmatpush.bf16.msra.mxu0 0
  %382 = vmatpush.bf16.msra.mxu0 0
  %383 = vmatpush.bf16.msra.mxu0 0
  %384 = vmatpush.bf16.msra.mxu0 0
  %385 = vmatpush.bf16.msra.mxu0 0
  %386 = vmatpush.bf16.msra.mxu0 %v133
  %387 = vmatpush.bf16.msra.mxu0 %v132
  %388 = vmatmul.bf16.gmra.mxu0 %v378
  %v389 = vpop.f32.mrf.mxu0
  %v390 = vadd.f32 0.0, %v389
  %v391 = vpop.f32.mrf.mxu0
  %392 = vdwg.mxu0
  %v393 = vadd.f32 %v112, %v390
  %v394 = vtanh.pop %v393
  %v395 = vxor.u32 %v393, 2147483648
  %v396 = vmul.f32 %v395, 1.442695
  %v397 = vpow.pop %v396
  %v398 = vadd.f32 %v397, 1.0
  %v399 = vrcp.pop %v398
  %v400 = vmul.f32 %v398, %v399
  %v401 = vsub.f32 1.0, %v400
  %v402 = vmul.f32 %v399, %v401
  %v403 = vadd.f32 %v399, %v402
  %vm404 = vweird.f32 %v398
  %vm405 = vweird.f32 %v399
  %vm406 = vmor %vm404, %vm405
  %v407 = vsel %vm406, %v399, %v403
  %v408 = vand.u32 2147483647, %v398
  %vm409 = vcmp.eq.f32.partialorder %v408, 8.507059e+37
  %v410 = vand.u32 %v398, 2147483648
  %v411 = vor.u32 1.1754944e-38, %v410
  %v412 = vsel %vm409, %v411, %v407
  %v413 = vmul.f32 1.0, %v412
  %v414 = vsel %vm49, %v394, %v413
  %v415 = vmul.f32 %v414, %v366
  %417 = vrot.lane.b32.xlu0 %v414, 64
  %v418 = vpop.permute.xlu0 %417
  %v420 = vmul.f32 %v414, %v418
  %422 = vrot.lane.b32.xlu0 %v420, 32
  %v423 = vpop.permute.xlu0 %422
  %v425 = vadd.f32 %v415, %v423
  %v426 = vtanh.pop %v425
  %428 = vrot.lane.b32.xlu0 %v426, 64
  %v429 = vpop.permute.xlu0 %428
  %v431 = vmul.f32 %v414, %v429
  %v432 = vpack.c.bf16 %v431, %v431
  %434 = vrot.lane.b32.xlu0 %v432, 32
  %v435 = vpop.permute.xlu0 %434
  %v437 = vsel %vm136, %v435, 0
  %439 = vmatpush.bf16.msra.mxu0 0
  %440 = vmatpush.bf16.msra.mxu0 0
  %441 = vmatpush.bf16.msra.mxu0 0
  %442 = vmatpush.bf16.msra.mxu0 0
  %443 = vmatpush.bf16.msra.mxu0 0
  %444 = vmatpush.bf16.msra.mxu0 0
  %445 = vmatpush.bf16.msra.mxu0 %v133
  %446 = vmatpush.bf16.msra.mxu0 %v132
  %447 = vmatmul.bf16.gmra.mxu0 %v437
  %v448 = vpop.f32.mrf.mxu0
  %v449 = vadd.f32 0.0, %v448
  %v450 = vpop.f32.mrf.mxu0
  %451 = vdwg.mxu0
  %v452 = vadd.f32 %v114, %v449
  %v453 = vtanh.pop %v452
  %v454 = vxor.u32 %v452, 2147483648
  %v455 = vmul.f32 %v454, 1.442695
  %v456 = vpow.pop %v455
  %v457 = vadd.f32 %v456, 1.0
  %v458 = vrcp.pop %v457
  %v459 = vmul.f32 %v457, %v458
  %v460 = vsub.f32 1.0, %v459
  %v461 = vmul.f32 %v458, %v460
  %v462 = vadd.f32 %v458, %v461
  %vm463 = vweird.f32 %v457
  %vm464 = vweird.f32 %v458
  %vm465 = vmor %vm463, %vm464
  %v466 = vsel %vm465, %v458, %v462
  %v467 = vand.u32 2147483647, %v457
  %vm468 = vcmp.eq.f32.partialorder %v467, 8.507059e+37
  %v469 = vand.u32 %v457, 2147483648
  %v470 = vor.u32 1.1754944e-38, %v469
  %v471 = vsel %vm468, %v470, %v466
  %v472 = vmul.f32 1.0, %v471
  %v473 = vsel %vm49, %v453, %v472
  %v474 = vmul.f32 %v473, %v425
  %476 = vrot.lane.b32.xlu0 %v473, 64
  %v477 = vpop.permute.xlu0 %476
  %v479 = vmul.f32 %v473, %v477
  %481 = vrot.lane.b32.xlu0 %v479, 32
  %v482 = vpop.permute.xlu0 %481
  %v484 = vadd.f32 %v474, %v482
  %v485 = vtanh.pop %v484
  %487 = vrot.lane.b32.xlu0 %v485, 64
  %v488 = vpop.permute.xlu0 %487
  %v490 = vmul.f32 %v473, %v488
  %v491 = vpack.c.bf16 %v490, %v490
  %493 = vrot.lane.b32.xlu0 %v491, 32
  %v494 = vpop.permute.xlu0 %493
  %v496 = vsel %vm136, %v494, 0
  %498 = vmatpush.bf16.msra.mxu0 0
  %499 = vmatpush.bf16.msra.mxu0 0
  %500 = vmatpush.bf16.msra.mxu0 0
  %501 = vmatpush.bf16.msra.mxu0 0
  %502 = vmatpush.bf16.msra.mxu0 0
  %503 = vmatpush.bf16.msra.mxu0 0
  %504 = vmatpush.bf16.msra.mxu0 %v133
  %505 = vmatpush.bf16.msra.mxu0 %v132
  %506 = vmatmul.bf16.gmra.mxu0 %v496
  %v507 = vpop.f32.mrf.mxu0
  %v508 = vadd.f32 0.0, %v507
  %v509 = vpop.f32.mrf.mxu0
  %510 = vdwg.mxu0
  %v511 = vadd.f32 %v117, %v508
  %v512 = vtanh.pop %v511
  %v513 = vxor.u32 %v511, 2147483648
  %v514 = vmul.f32 %v513, 1.442695
  %v515 = vpow.pop %v514
  %v516 = vadd.f32 %v515, 1.0
  %v517 = vrcp.pop %v516
  %v518 = vmul.f32 %v516, %v517
  %v519 = vsub.f32 1.0, %v518
  %v520 = vmul.f32 %v517, %v519
  %v521 = vadd.f32 %v517, %v520
  %vm522 = vweird.f32 %v516
  %vm523 = vweird.f32 %v517
  %vm524 = vmor %vm522, %vm523
  %v525 = vsel %vm524, %v517, %v521
  %v526 = vand.u32 2147483647, %v516
  %vm527 = vcmp.eq.f32.partialorder %v526, 8.507059e+37
  %v528 = vand.u32 %v516, 2147483648
  %v529 = vor.u32 1.1754944e-38, %v528
  %v530 = vsel %vm527, %v529, %v525
  %v531 = vmul.f32 1.0, %v530
  %v532 = vsel %vm49, %v512, %v531
  %v533 = vmul.f32 %v532, %v484
  %535 = vrot.lane.b32.xlu0 %v532, 64
  %v536 = vpop.permute.xlu0 %535
  %v538 = vmul.f32 %v532, %v536
  %540 = vrot.lane.b32.xlu0 %v538, 32
  %v541 = vpop.permute.xlu0 %540
  %v543 = vadd.f32 %v533, %v541
  %v544 = vtanh.pop %v543
  %546 = vrot.lane.b32.xlu0 %v544, 64
  %v547 = vpop.permute.xlu0 %546
  %v549 = vmul.f32 %v532, %v547
  %v550 = vpack.c.bf16 %v549, %v549
  %552 = vrot.lane.b32.xlu0 %v550, 32
  %v553 = vpop.permute.xlu0 %552
  %v555 = vsel %vm136, %v553, 0
  %557 = vmatpush.bf16.msra.mxu0 0
  %558 = vmatpush.bf16.msra.mxu0 0
  %559 = vmatpush.bf16.msra.mxu0 0
  %560 = vmatpush.bf16.msra.mxu0 0
  %561 = vmatpush.bf16.msra.mxu0 0
  %562 = vmatpush.bf16.msra.mxu0 0
  %563 = vmatpush.bf16.msra.mxu0 %v133
  %564 = vmatpush.bf16.msra.mxu0 %v132
  %565 = vmatmul.bf16.gmra.mxu0 %v555
  %v566 = vpop.f32.mrf.mxu0
  %v567 = vadd.f32 0.0, %v566
  %v568 = vpop.f32.mrf.mxu0
  %569 = vdwg.mxu0
  %v570 = vadd.f32 %v119, %v567
  %v571 = vtanh.pop %v570
  %v572 = vxor.u32 %v570, 2147483648
  %v573 = vmul.f32 %v572, 1.442695
  %v574 = vpow.pop %v573
  %v575 = vadd.f32 %v574, 1.0
  %v576 = vrcp.pop %v575
  %v577 = vmul.f32 %v575, %v576
  %v578 = vsub.f32 1.0, %v577
  %v579 = vmul.f32 %v576, %v578
  %v580 = vadd.f32 %v576, %v579
  %vm581 = vweird.f32 %v575
  %vm582 = vweird.f32 %v576
  %vm583 = vmor %vm581, %vm582
  %v584 = vsel %vm583, %v576, %v580
  %v585 = vand.u32 2147483647, %v575
  %vm586 = vcmp.eq.f32.partialorder %v585, 8.507059e+37
  %v587 = vand.u32 %v575, 2147483648
  %v588 = vor.u32 1.1754944e-38, %v587
  %v589 = vsel %vm586, %v588, %v584
  %v590 = vmul.f32 1.0, %v589
  %v591 = vsel %vm49, %v571, %v590
  %v592 = vmul.f32 %v591, %v543
  %594 = vrot.lane.b32.xlu0 %v591, 64
  %v595 = vpop.permute.xlu0 %594
  %v597 = vmul.f32 %v591, %v595
  %599 = vrot.lane.b32.xlu0 %v597, 32
  %v600 = vpop.permute.xlu0 %599
  %v602 = vadd.f32 %v592, %v600
  %v603 = vtanh.pop %v602
  %605 = vrot.lane.b32.xlu0 %v603, 64
  %v606 = vpop.permute.xlu0 %605
  %v608 = vmul.f32 %v591, %v606
  %610 = vrot.lane.b32.xlu0 %v608, 32
  %v611 = vpop.permute.xlu0 %610
  %613 = vst.msk [vmem:[#allocation2] sm:$0xff] %vm136, %v611
  %615 = vrot.lane.b32.xlu0 %v602, 96
  %v616 = vpop.permute.xlu0 %615
  %618 = vst.msk [vmem:[#allocation3] sm:$0xff] %vm136, %v616
  // Predicated region
  $region30: #{tpu_custom_call.1} parent=0 // pred_check
    %p619 = pneg %p26
  $region31: #{tpu_custom_call.1} parent=0 // pred_check_branch
    %621 = sbr.rel (%p619) target = $region33
  $region32: #{tpu_custom_call.1} parent=0 // pred_region
    %v622 = vld [vmem:[%s4] sm:$0xff]
    %v623 = vld [vmem:[%s4 + $0x8] sm:$0xff]
    %v624 = vld [vmem:[%s4 + $0x10] sm:$0xff]
    %v625 = vld [vmem:[%s4 + $0x18] sm:$0xff]
    %v626 = vld [vmem:[#allocation4] sm:$0x1]
    %v628 = vperm.slane %v626, 0
    %v630 = vsel %vm136, %v611, 0
    %632 = vmatpush.msra.mxu0 0.0
    %633 = vmatpush.msra.mxu0 0.0
    %634 = vmatpush.msra.mxu0 0.0
    %635 = vmatpush.msra.mxu0 0.0
    %636 = vmatpush.msra.mxu0 0.0
    %637 = vmatpush.msra.mxu0 0.0
    %638 = vmatpush.msra.mxu0 0.0
    %639 = vmatpush.msra.mxu0 0.0
    %640 = vmatpush.msra.mxu0 0.0
    %641 = vmatpush.msra.mxu0 0.0
    %642 = vmatpush.msra.mxu0 0.0
    %643 = vmatpush.msra.mxu0 0.0
    %644 = vmatpush.msra.mxu0 %v625
    %645 = vmatpush.msra.mxu0 %v624
    %646 = vmatpush.msra.mxu0 %v623
    %647 = vmatpush.msra.mxu0 %v622
    %648 = vmatmul.f32.gmra.mxu0 %v630
    %v649 = vpop.f32.mrf.mxu0
    %v650 = vadd.f32 %v628, %v649
    %651 = vdwg.mxu0
    %vm652 = vcmask 7168
    %653 = vst.msk [vmem:[%s6] sm:$0xff] %vm652, %v650
  $region33: #{tpu_custom_call.1} parent=0 // pred_fallthru
    _
  // Predicated region
  $region34: #{tpu_custom_call.1} parent=0 // pred_check
    _
  $region35: #{tpu_custom_call.1} parent=0 // pred_check_branch
    %655 = sbr.rel (0) target = $region37
  $region36: #{tpu_custom_call.1} parent=0 // pred_region
    _
  $region37: #{tpu_custom_call.1} parent=0 // pred_fallthru
    _
  // Predicated region
  $region38: #{tpu_custom_call.1} parent=0 // pred_check
    _
  $region39: #{tpu_custom_call.1} parent=0 // pred_check_branch
    %657 = sbr.rel (0) target = $region41
  $region40: #{tpu_custom_call.1} parent=0 // pred_region
    _
  $region41: #{tpu_custom_call.1} parent=0 // pred_fallthru
    _

</llo_original>
